<compile_context>
chip_gen: v6e
topology: v6e:2x2x1
jax: 0.10.0
libtpu: 0.0.40
codegen_flags: <defaults>
</compile_context>

<pallas_src>
import numpy as np
import jax
import jax.numpy as jnp
from jax.experimental import pallas as pl
from jax.experimental.pallas import tpu as pltpu


def _round_up(x, m):
    return ((x + m - 1) // m) * m


def _ratio(tot, use_e):
    zero_e = tot - use_e
    safe = jnp.where(tot > 0, tot, jnp.ones_like(tot))
    return jnp.where(tot > 0, zero_e / safe, jnp.ones_like(tot))


def _make_single_kernel(n_chunks, chunk_kind):
    """Whole DFT matrix resident in VMEM: one grid step over frequencies."""

    def kernel(x_ref, cs_ref, use_ref, o_ref):
        fh = n_chunks * 128
        # [tb, 2*Fp] f32 : [real | imag] of the (un-normalized) rfft
        y = jnp.dot(x_ref[...], cs_ref[...], preferred_element_type=jnp.float32)
        tot_p = None
        use_p = None
        for c in range(n_chunks):                 # static loop over 128-lane chunks
            lo = c * 128
            r = y[:, lo:lo + 128]
            im = y[:, fh + lo:fh + lo + 128]
            m = jnp.sqrt(r * r + im * im)         # |X|; padded freqs give exactly 0
            tot_p = m if tot_p is None else tot_p + m
            kind = chunk_kind[c]
            if kind == 1:                         # chunk fully inside the band
                use_p = m if use_p is None else use_p + m
            elif kind == 2:                       # band-boundary chunk: mask multiply
                mu = m * use_ref[:, lo:lo + 128]
                use_p = mu if use_p is None else use_p + mu
            # kind == 0: fully outside the band -> no band work at all
        tot = jnp.sum(tot_p, axis=-1, keepdims=True)          # one cross-lane reduce
        if use_p is None:
            use_e = jnp.zeros_like(tot)
        else:
            use_e = jnp.sum(use_p, axis=-1, keepdims=True)
        o_ref[...] = _ratio(tot, use_e)

    return kernel


def _make_tiled_kernel(n_chunks):
    """Streamed CS tiles with lane-parallel [tb,128] accumulators across the grid."""

    def kernel(x_ref, cs_ref, use_ref, o_ref, use_acc, tot_acc):
        j = pl.program_id(1)
        fh = n_chunks * 128

        @pl.when(j == 0)
        def _init():
            use_acc[...] = jnp.zeros_like(use_acc)
            tot_acc[...] = jnp.zeros_like(tot_acc)

        y = jnp.dot(x_ref[...], cs_ref[...], preferred_element_type=jnp.float32)
        tot_p = None
        use_p = None
        for c in range(n_chunks):
            lo = c * 128
            r = y[:, lo:lo + 128]
            im = y[:, fh + lo:fh + lo + 128]
            m = jnp.sqrt(r * r + im * im)
            mu = m * use_ref[:, lo:lo + 128]
            tot_p = m if tot_p is None else tot_p + m
            use_p = mu if use_p is None else use_p + mu
        tot_acc[...] += tot_p                     # pure VPU adds, no XLU in the loop
        use_acc[...] += use_p

        @pl.when(j == pl.num_programs(1) - 1)
        def _finalize():
            tot = jnp.sum(tot_acc[...], axis=-1, keepdims=True)
            use_e = jnp.sum(use_acc[...], axis=-1, keepdims=True)
            o_ref[...] = _ratio(tot, use_e)

    return kernel


def irrelevant_power_ratio(preds, Fs, high_pass, low_pass):
    """preds: [B, T] float -> [B] float32, same semantics as the torch module."""
    preds = jnp.asarray(preds, jnp.float32)
    B, T = preds.shape
    F = T // 2 + 1

    # ---- static padding / tiling decisions ---------------------------------
    Tp = _round_up(T, 128)                        # fill the MXU contraction dim
    B8 = _round_up(B, 8)
    if B8 >= 16:
        # >= 2 batch tiles so the 'parallel' axis can shard over v7x's 2 TCs
        tb = min(_round_up((B8 + 1) // 2, 8), 256)
    else:
        tb = B8
    B_pad = _round_up(B8, tb)
    n_b = B_pad // tb

    # VMEM budget for double-buffered CS tile + x block (safe on 64 MiB v7x,
    # conservative on 128 MiB v5e/v6e).
    BUDGET = 36 * 1024 * 1024
    x_buf = 2 * tb * Tp * 2                       # bf16, double-buffered

    def cs_buf(thw):                              # bf16, double-buffered CS tile
        return 2 * Tp * 2 * thw * 2

    F128 = _round_up(F, 128)
    if cs_buf(F128) + x_buf <= BUDGET:
        th = F128                                 # single-tile fast path (n_f == 1)
    else:
        th = 128
        for cand in (4096, 2048, 1024, 512, 256):
            if cs_buf(cand) + x_buf <= BUDGET:
                th = cand
                break
        # TODO(synk): for extreme T (x block alone exceeding the budget) the
        # contraction dim should be tiled too; not needed for rPPG lengths.
    Fp = _round_up(F, th)
    n_f = Fp // th
    n_chunks = th // 128

    # ---- DFT matrix (numpy fp64 -> bf16), 1/T norm dropped (cancels) --------
    n = np.arange(T, dtype=np.float64)[:, None]               # [T, 1]
    k = np.arange(Fp, dtype=np.float64)[None, :]              # [1, Fp]
    ang = 2.0 * np.pi * n * k / float(T)
    valid = (np.arange(Fp) < F).astype(np.float64)[None, :]   # zero padded freqs
    cos_m = np.cos(ang) * valid
    sin_m = -np.sin(ang) * valid
    # per-tile interleave: each (Tp, 2*th) block holds [cos | -sin] of the SAME
    # th frequencies so |X| can be formed inside one tile. Rows T..Tp are zero.
    cs_np = np.zeros((Tp, 2 * Fp), np.float32)
    cs_np[:T] = np.concatenate(
        [cos_m.reshape(T, n_f, th), sin_m.reshape(T, n_f, th)], axis=2
    ).reshape(T, 2 * Fp).astype(np.float32)
    cs = jnp.asarray(cs_np).astype(jnp.bfloat16)
    # TODO(synk): int8 CS on v5e/v6e (fp8 on v7x) would halve the CS HBM stream;
    # kept bf16 here as the single portable fast path.

    # ---- band mask (natural frequency order, padded lanes -> 0) -------------
    freqs = np.linspace(0.0, Fs / 2.0, F)                      # matches torch.linspace
    use_np = np.logical_and(freqs >= high_pass / 60.0,
                            freqs <= low_pass / 60.0).astype(np.float32)
    use_pad = np.zeros((1, Fp), np.float32)
    use_pad[0, :F] = use_np
    use_mask = jnp.asarray(use_pad)

    # ---- x: pad batch + contraction with zeros, cast to bf16 ONCE -----------
    x = jnp.pad(preds, ((0, B_pad - B), (0, Tp - T))).astype(jnp.bfloat16)

    tile_bytes = cs_buf(th) + x_buf + 2 * Fp * 4 + 4 * tb * 128 + 4096
    vmem_limit = min(48 * 1024 * 1024,
                     max(32 * 1024 * 1024, tile_bytes + 16 * 1024 * 1024))

    cost = pl.CostEstimate(
        flops=2 * B_pad * Tp * 2 * Fp,
        transcendentals=B_pad * Fp,
        bytes_accessed=Tp * 2 * Fp * 2 + B_pad * Tp * 2 + Fp * 4 + B_pad * 4,
    )

    if n_f == 1:
        # classify each 128-lane chunk of the single frequency tile (static)
        kinds = []
        for c in range(n_chunks):
            chunk = use_pad[0, c * 128:(c + 1) * 128]
            if not chunk.any():
                kinds.append(0)
            elif chunk.all():
                kinds.append(1)
            else:
                kinds.append(2)
        grid_spec = pltpu.PrefetchScalarGridSpec(
            num_scalar_prefetch=0,
            grid=(n_b,),
            in_specs=[
                pl.BlockSpec((tb, Tp), lambda b: (b, 0)),          # bf16 signal tile
                pl.BlockSpec((Tp, 2 * Fp), lambda b: (0, 0)),      # whole DFT matrix
                pl.BlockSpec((1, Fp), lambda b: (0, 0)),           # band mask
            ],
            out_specs=pl.BlockSpec((tb, 1), lambda b: (b, 0)),
        )
        kernel = _make_single_kernel(n_chunks, tuple(kinds))
        dims = ("parallel",)
    else:
        grid_spec = pltpu.PrefetchScalarGridSpec(
            num_scalar_prefetch=0,
            grid=(n_b, n_f),                                       # reduction axis last
            in_specs=[
                pl.BlockSpec((tb, Tp), lambda b, j: (b, 0)),       # resident over j
                pl.BlockSpec((Tp, 2 * th), lambda b, j: (0, j)),   # streamed DFT tiles
                pl.BlockSpec((1, th), lambda b, j: (0, j)),        # band mask tile
            ],
            out_specs=pl.BlockSpec((tb, 1), lambda b, j: (b, 0)),
            scratch_shapes=[pltpu.VMEM((tb, 128), jnp.float32),    # use-band partials
                            pltpu.VMEM((tb, 128), jnp.float32)],   # total partials
        )
        kernel = _make_tiled_kernel(n_chunks)
        dims = ("parallel", "arbitrary")

    out = pl.pallas_call(
        kernel,
        out_shape=jax.ShapeDtypeStruct((B_pad, 1), jnp.float32),
        grid_spec=grid_spec,
        compiler_params=pltpu.CompilerParams(
            dimension_semantics=dims,
            vmem_limit_bytes=vmem_limit,
        ),
        cost_estimate=cost,
    )(x, cs, use_mask)
    # Padded batch rows have tot == 0 and therefore output 1.0; the [:B] slice
    # below is what removes them - do not drop it.
    return out[:B, 0]


def _reference(preds, Fs, high_pass, low_pass):
    """Pure-JAX mirror of the torch forward (for the self-test)."""
    preds = jnp.asarray(preds, jnp.float32)
    X = jnp.fft.rfft(preds, axis=-1, norm="forward")
    F = X.shape[-1]
    freqs = np.linspace(0.0, Fs / 2.0, F)
    use = np.logical_and(freqs >= high_pass / 60.0, freqs <= low_pass / 60.0)
    mag = jnp.abs(X)
    use_e = jnp.sum(mag * use[None, :], axis=-1)
    tot = jnp.sum(mag, axis=-1)
    zero_e = tot - use_e
    return jnp.where(tot > 0, zero_e / jnp.where(tot > 0, tot, 1.0),
                     jnp.ones_like(tot))


if __name__ == "__main__":
    # typical rPPG settings: 30 Hz sampling, 40-250 bpm band
    Fs, high_pass, low_pass = 30.0, 40.0, 250.0

    B, T = 4, 64
    key = jax.random.PRNGKey(0)
    preds = jax.random.normal(key, (B, T), dtype=jnp.float32)

    out = jax.block_until_ready(irrelevant_power_ratio(preds, Fs, high_pass, low_pass))
    ref = jax.block_until_ready(_reference(preds, Fs, high_pass, low_pass))

    # bf16 DFT matrix + bf16 activations on the MXU (f32 accumulation).
    np.testing.assert_allclose(np.asarray(out), np.asarray(ref),
                               rtol=2e-2, atol=5e-3)
    print("KERNEL_OK")
</pallas_src>

<mosaic_0001>
module attributes {stable_mosaic.version = 11 : i64} {
  func.func @kernel(%arg0: i32, %arg1: memref<8x128xbf16, #tpu.memory_space<vmem>>, %arg2: memref<128x256xbf16, #tpu.memory_space<vmem>>, %arg3: memref<1x128xf32, #tpu.memory_space<vmem>>, %arg4: memref<8x1xf32, #tpu.memory_space<vmem>>) attributes {dimension_semantics = [#tpu.dimension_semantics<parallel>], iteration_bounds = array<i64: 1>, scalar_prefetch = 0 : i64, scratch_operands = 0 : i64, tpu.core_type = #tpu.core_type<tc>, window_params = [{transform_indices = @transform_0, window_bounds = array<i64: 8, 128>}, {pipeline_mode = #tpu.pipeline_mode<synchronous>, transform_indices = @transform_1, window_bounds = array<i64: 128, 256>}, {pipeline_mode = #tpu.pipeline_mode<synchronous>, transform_indices = @transform_2, window_bounds = array<i64: 1, 128>}, {transform_indices = @transform_3, window_bounds = array<i64: 8, 1>}]} {
    %c0 = arith.constant 0 : index
    %c0_0 = arith.constant 0 : index
    %0 = vector.load %arg1[%c0, %c0_0] : memref<8x128xbf16, #tpu.memory_space<vmem>>, vector<8x128xbf16>
    %c0_1 = arith.constant 0 : index
    %c0_2 = arith.constant 0 : index
    %1 = vector.load %arg2[%c0_1, %c0_2] : memref<128x256xbf16, #tpu.memory_space<vmem>>, vector<128x256xbf16>
    %cst = arith.constant dense<0.000000e+00> : vector<8x256xf32>
    %2 = tpu.matmul %0, %1, %cst {dimension_numbers = #tpu.dot_dimension_numbers<[1], [0], [0], [1], [0, 0, 1, 1], [], []>} : vector<8x128xbf16>, vector<128x256xbf16>, vector<8x256xf32> -> vector<8x256xf32>
    %3 = vector.extract_strided_slice %2 {offsets = [0, 0], sizes = [8, 128], strides = [1, 1]} : vector<8x256xf32> to vector<8x128xf32>
    %4 = vector.extract_strided_slice %2 {offsets = [0, 128], sizes = [8, 128], strides = [1, 1]} : vector<8x256xf32> to vector<8x128xf32>
    %5 = arith.mulf %3, %3 : vector<8x128xf32>
    %6 = arith.mulf %4, %4 : vector<8x128xf32>
    %7 = arith.addf %5, %6 : vector<8x128xf32>
    %8 = math.sqrt %7 : vector<8x128xf32>
    %c0_3 = arith.constant 0 : index
    %c0_4 = arith.constant 0 : index
    %9 = vector.load %arg3[%c0_3, %c0_4] : memref<1x128xf32, #tpu.memory_space<vmem>>, vector<1x128xf32>
    %10 = vector.broadcast %9 : vector<1x128xf32> to vector<8x128xf32>
    %11 = arith.mulf %8, %10 : vector<8x128xf32>
    %cst_5 = arith.constant dense<0.000000e+00> : vector<8xf32>
    %12 = vector.multi_reduction <add>, %8, %cst_5 [1] : vector<8x128xf32> to vector<8xf32>
    %13 = vector.shape_cast %12 : vector<8xf32> to vector<8x1xf32>
    %cst_6 = arith.constant dense<0.000000e+00> : vector<8xf32>
    %14 = vector.multi_reduction <add>, %11, %cst_6 [1] : vector<8x128xf32> to vector<8xf32>
    %15 = vector.shape_cast %14 : vector<8xf32> to vector<8x1xf32>
    %16 = arith.subf %13, %15 : vector<8x1xf32>
    %cst_7 = arith.constant 0.000000e+00 : f32
    %17 = vector.broadcast %cst_7 : f32 to vector<8x1xf32>
    %18 = arith.cmpf ogt, %13, %17 : vector<8x1xf32>
    %cst_8 = arith.constant 1.000000e+00 : f32
    %19 = vector.broadcast %cst_8 : f32 to vector<8x1xf32>
    %20 = arith.select %18, %13, %19 : vector<8x1xi1>, vector<8x1xf32>
    %cst_9 = arith.constant 0.000000e+00 : f32
    %21 = vector.broadcast %cst_9 : f32 to vector<8x1xf32>
    %22 = arith.cmpf ogt, %13, %21 : vector<8x1xf32>
    %23 = arith.divf %16, %20 : vector<8x1xf32>
    %cst_10 = arith.constant 1.000000e+00 : f32
    %24 = vector.broadcast %cst_10 : f32 to vector<8x1xf32>
    %25 = arith.select %22, %23, %24 : vector<8x1xi1>, vector<8x1xf32>
    %c0_11 = arith.constant 0 : index
    %c0_12 = arith.constant 0 : index
    %26 = vector.load %arg4[%c0_11, %c0_12] : memref<8x1xf32, #tpu.memory_space<vmem>>, vector<8x1xf32>
    tpu.vector_store %arg4[%c0_11, %c0_12], %25 {strides = array<i32>} : memref<8x1xf32, #tpu.memory_space<vmem>>, vector<8x1xf32>,
    return
  }
  func.func @transform_0(%arg0: i32) -> (i32, i32) {
    %c0_i32 = arith.constant 0 : i32
    %c0_i32_0 = arith.constant 0 : i32
    return %arg0, %c0_i32 : i32, i32
  }
  func.func @transform_1(%arg0: i32) -> (i32, i32) {
    %c0_i32 = arith.constant 0 : i32
    %c0_i32_0 = arith.constant 0 : i32
    %c0_i32_1 = arith.constant 0 : i32
    return %c0_i32, %c0_i32_0 : i32, i32
  }
  func.func @transform_2(%arg0: i32) -> (i32, i32) {
    %c0_i32 = arith.constant 0 : i32
    %c0_i32_0 = arith.constant 0 : i32
    %c0_i32_1 = arith.constant 0 : i32
    return %c0_i32, %c0_i32_0 : i32, i32
  }
  func.func @transform_3(%arg0: i32) -> (i32, i32) {
    %c0_i32 = arith.constant 0 : i32
    %c0_i32_0 = arith.constant 0 : i32
    return %arg0, %c0_i32 : i32, i32
  }
}

</mosaic_0001>

<llo_original>
// kernel: tpu_custom_call.1
$region0: #{tpu_custom_call.1}
  #allocation0 [shape = 'u32[]', space=smem, size = 0x4, offset = 0x4, fixed_abs, tag = 'smem constant byte address 0x4 - core index']
  #allocation1 [shape = 'u32[144,128]{1,0:T(1,128)}', space=vmem, size = 0x12000, scoped, tag = 'internal scratch']
  %s0 = inlined_call_operand.hbm [shape: bf16[8,128], index: 0, kind: input, shape index: {}]
  %s1 = inlined_call_operand.hbm [shape: bf16[128,256], index: 1, kind: input, shape index: {}]
  %s2 = inlined_call_operand.vmem [shape: f32[1,128], index: 2, kind: input, shape index: {}]
  %s3 = inlined_call_operand.vmem [shape: f32[8,1], index: 3, kind: output, shape index: {}]
  %s4 = sld [smem:[#allocation0]]
  $region30: #{tpu_custom_call.1} parent=0
    _
  %s6 = ssub.s32 1, %s4
  %s7 = scalar_select 0, %s6, %s4
  $region1: #{tpu_custom_call.1} parent=0
    #allocation2 [shape = 'u8[2048]{0}', space=vmem, size = 0x800, scoped, tag = 'input window, operand 0, single buffered']
    #allocation3 [shape = 's32[1]{0}', space=sflag, size = 0x4, scoped, tag = 'scoped memory for tpu_custom_call.1']
    #allocation4 [shape = 'u8[65536]{0}', space=vmem, size = 0x10000, scoped, tag = 'input window, operand 1, single buffered']
    #allocation5 [shape = 's32[1]{0}', space=sflag, size = 0x4, scoped, tag = 'scoped memory for tpu_custom_call.1']
    %8 = vsyncpa [#allocation3], 0
    %9 = vsyncpa [#allocation5], 0
    // Predicated region
    $region2: #{tpu_custom_call.1} parent=1 // pred_check
      _
    $region3: #{tpu_custom_call.1} parent=1 // pred_check_branch
      %11 = sbr.rel (0) target = $region5
    $region4: #{tpu_custom_call.1} parent=1 // pred_region
      %s13 = ssub.s32 64, 64
      %14 = vsyncadd [#allocation3], %s13
      %s16 = sshll.u32 [#allocation2], 4
      %s17 = int_to_ptr.vmem [resolvable:$true] %s16
      %19 = dma.hbm_to_vmem [thread:$0]  %s0, 64, %s17, [#allocation3]
    $region5: #{tpu_custom_call.1} parent=1 // pred_fallthru
      _
    // Predicated region
    $region6: #{tpu_custom_call.1} parent=1 // pred_check
      _
    $region7: #{tpu_custom_call.1} parent=1 // pred_check_branch
      %21 = sbr.rel (0) target = $region9
    $region8: #{tpu_custom_call.1} parent=1 // pred_region
      %s23 = ssub.s32 2048, 2048
      %24 = vsyncadd [#allocation5], %s23
      %s25 = sshll.u32 [#allocation4], 4
      %s26 = int_to_ptr.vmem [resolvable:$true] %s25
      %31 = dma.hbm_to_vmem [thread:$0]  %s1, 2048, %s26, [#allocation5], 128, 128, 8
    $region9: #{tpu_custom_call.1} parent=1 // pred_fallthru
      _
    // Predicated region
    $region10: #{tpu_custom_call.1} parent=1 // pred_check
      _
    $region11: #{tpu_custom_call.1} parent=1 // pred_check_branch
      %33 = sbr.rel (0) target = $region13
    $region12: #{tpu_custom_call.1} parent=1 // pred_region
      _
    $region13: #{tpu_custom_call.1} parent=1 // pred_fallthru
      _
    // Predicated region
    $region14: #{tpu_custom_call.1} parent=1 // pred_check
      _
    $region15: #{tpu_custom_call.1} parent=1 // pred_check_branch
      %35 = sbr.rel (0) target = $region17
    $region16: #{tpu_custom_call.1} parent=1 // pred_region
      %36 = dma.done [#allocation3], 64
    $region17: #{tpu_custom_call.1} parent=1 // pred_fallthru
      _
    // Predicated region
    $region18: #{tpu_custom_call.1} parent=1 // pred_check
      _
    $region19: #{tpu_custom_call.1} parent=1 // pred_check_branch
      %38 = sbr.rel (0) target = $region21
    $region20: #{tpu_custom_call.1} parent=1 // pred_region
      %39 = dma.done [#allocation5], 2048
    $region21: #{tpu_custom_call.1} parent=1 // pred_fallthru
      _
    %v41 = vld [vmem:[#allocation2] sm:$0xf]
    %v42 = vld [vmem:[#allocation4] sm:$0xff]
    %v43 = vld [vmem:[#allocation4 + $0x8] sm:$0xff]
    %v44 = vld [vmem:[#allocation4 + $0x10] sm:$0xff]
    %v45 = vld [vmem:[#allocation4 + $0x18] sm:$0xff]
    %v46 = vld [vmem:[#allocation4 + $0x20] sm:$0xff]
    %v47 = vld [vmem:[#allocation4 + $0x28] sm:$0xff]
    %v48 = vld [vmem:[#allocation4 + $0x30] sm:$0xff]
    %v49 = vld [vmem:[#allocation4 + $0x38] sm:$0xff]
    %v50 = vld [vmem:[#allocation4 + $0x40] sm:$0xff]
    %v51 = vld [vmem:[#allocation4 + $0x48] sm:$0xff]
    %v52 = vld [vmem:[#allocation4 + $0x50] sm:$0xff]
    %v53 = vld [vmem:[#allocation4 + $0x58] sm:$0xff]
    %v54 = vld [vmem:[#allocation4 + $0x60] sm:$0xff]
    %v55 = vld [vmem:[#allocation4 + $0x68] sm:$0xff]
    %v56 = vld [vmem:[#allocation4 + $0x70] sm:$0xff]
    %v57 = vld [vmem:[#allocation4 + $0x78] sm:$0xff]
    %v74 = vunpack.c.l.b16 %v42
    %v75 = vunpack.c.h.b16 %v42
    %v76 = vunpack.c.l.b16 %v43
    %v77 = vunpack.c.h.b16 %v43
    %v78 = vunpack.c.l.b16 %v44
    %v79 = vunpack.c.h.b16 %v44
    %v80 = vunpack.c.l.b16 %v45
    %v81 = vunpack.c.h.b16 %v45
    %v82 = vunpack.c.l.b16 %v46
    %v83 = vunpack.c.h.b16 %v46
    %v84 = vunpack.c.l.b16 %v47
    %v85 = vunpack.c.h.b16 %v47
    %v86 = vunpack.c.l.b16 %v48
    %v87 = vunpack.c.h.b16 %v48
    %v88 = vunpack.c.l.b16 %v49
    %v89 = vunpack.c.h.b16 %v49
    %v90 = vunpack.c.l.b16 %v50
    %v91 = vunpack.c.h.b16 %v50
    %v92 = vunpack.c.l.b16 %v51
    %v93 = vunpack.c.h.b16 %v51
    %v94 = vunpack.c.l.b16 %v52
    %v95 = vunpack.c.h.b16 %v52
    %v96 = vunpack.c.l.b16 %v53
    %v97 = vunpack.c.h.b16 %v53
    %v98 = vunpack.c.l.b16 %v54
    %v99 = vunpack.c.h.b16 %v54
    %v100 = vunpack.c.l.b16 %v55
    %v101 = vunpack.c.h.b16 %v55
    %v102 = vunpack.c.l.b16 %v56
    %v103 = vunpack.c.h.b16 %v56
    %v104 = vunpack.c.l.b16 %v57
    %v105 = vunpack.c.h.b16 %v57
    %v106 = vpack.c.b16 %v76, %v74
    %v107 = vpack.c.b16 %v77, %v75
    %v108 = vpack.c.b16 %v80, %v78
    %v109 = vpack.c.b16 %v81, %v79
    %v110 = vpack.c.b16 %v84, %v82
    %v111 = vpack.c.b16 %v85, %v83
    %v112 = vpack.c.b16 %v88, %v86
    %v113 = vpack.c.b16 %v89, %v87
    %v114 = vpack.c.b16 %v92, %v90
    %v115 = vpack.c.b16 %v93, %v91
    %v116 = vpack.c.b16 %v96, %v94
    %v117 = vpack.c.b16 %v97, %v95
    %v118 = vpack.c.b16 %v100, %v98
    %v119 = vpack.c.b16 %v101, %v99
    %v120 = vpack.c.b16 %v104, %v102
    %v121 = vpack.c.b16 %v105, %v103
    %138 = vmatprep.subr.bf16.mxu0 %v121
    %139 = vmatpush1.bf16.msra.mxu0 %v120
    %140 = vmatprep.subr.bf16.mxu0 %v119
    %141 = vmatpush1.bf16.msra.mxu0 %v118
    %142 = vmatprep.subr.bf16.mxu0 %v117
    %143 = vmatpush1.bf16.msra.mxu0 %v116
    %144 = vmatprep.subr.bf16.mxu0 %v115
    %145 = vmatpush1.bf16.msra.mxu0 %v114
    %146 = vmatprep.subr.bf16.mxu0 %v113
    %147 = vmatpush1.bf16.msra.mxu0 %v112
    %148 = vmatprep.subr.bf16.mxu0 %v111
    %149 = vmatpush1.bf16.msra.mxu0 %v110
    %150 = vmatprep.subr.bf16.mxu0 %v109
    %151 = vmatpush1.bf16.msra.mxu0 %v108
    %152 = vmatprep.subr.bf16.mxu0 %v107
    %153 = vmatpush1.bf16.msra.mxu0 %v106
    %154 = vmatprep.subr.bf16.mxu0 0
    %155 = vmatpush2.bf16.msra.mxu0 0
    %156 = vmatprep.subr.bf16.mxu0 0
    %157 = vmatpush2.bf16.msra.mxu0 0
    %158 = vmatprep.subr.bf16.mxu0 0
    %159 = vmatpush2.bf16.msra.mxu0 0
    %160 = vmatprep.subr.bf16.mxu0 0
    %161 = vmatpush2.bf16.msra.mxu0 0
    %162 = vmatprep.subr.bf16.mxu0 0
    %163 = vmatpush2.bf16.msra.mxu0 0
    %164 = vmatprep.subr.bf16.mxu0 0
    %165 = vmatpush2.bf16.msra.mxu0 0
    %166 = vmatprep.subr.bf16.mxu0 0
    %167 = vmatpush2.bf16.msra.mxu0 0
    %168 = vmatprep.subr.bf16.mxu0 0
    %169 = vmatpush2.bf16.msra.mxu0 0
    %170 = vmatprep.mubr.bf16.mxu0 0
    %171 = vmatmul.mubr.bf16.gmra.mxu0 %v41
    %v172 = vpop.f32.mrf.mxu0
    %v173 = vadd.f32 0.0, %v172
    %v174 = vpop.f32.mrf.mxu0
    %v175 = vadd.f32 0.0, %v174
    %v176 = vpop.f32.mrf.mxu0
    %v177 = vpop.f32.mrf.mxu0
    %178 = vdwg.mxu0
    %v179 = vmul.f32 %v173, %v173
    %v180 = vmul.f32 %v175, %v175
    %v181 = vadd.f32 %v179, %v180
    %v182 = vrsqrt.pop %v181
    %v183 = vmul.f32 %v181, %v182
    %vm184 = vcmp.eq.f32.partialorder %v181, inf
    %v185 = vsel %vm184, %v181, %v183
    %vm186 = vcmp.eq.f32.partialorder %v181, 0.0
    %v187 = vand.u32 %v181, 2147483648
    %v188 = vsel %vm186, %v187, %v185
    %v189 = vld [vmem:[%s2] sm:$0x1]
    %v191 = vlaneseq
    %v192 = vshrl.u32 %v191, 7
    %v193 = vsub.s32 0, %v192
    %v194 = vrot.slane %v189, %v193
    %v196 = vmul.f32 %v188, %v194
    %197 = vadd.xlane.f32.xlu0 %v188
    %v198 = vpop.xlane.xlu0 %197
    %199 = vadd.xlane.f32.xlu0 %v196
    %v200 = vpop.xlane.xlu0 %199
    %v201 = vsub.f32 %v198, %v200
    %vm202 = vcmp.gt.f32.partialorder %v198, 0.0
    %v203 = vsel %vm202, %v198, 1.0
    %v204 = vrcp.pop %v203
    %v205 = vmul.f32 %v201, %v204
    %v206 = vsel %vm202, %v205, 1.0
    %vm207 = vcmask 7168
    %208 = vst.msk [vmem:[%s3] sm:$0xff] %vm207, %v206
    // Predicated region
    $region22: #{tpu_custom_call.1} parent=1 // pred_check
      _
    $region23: #{tpu_custom_call.1} parent=1 // pred_check_branch
      %210 = sbr.rel (0) target = $region25
    $region24: #{tpu_custom_call.1} parent=1 // pred_region
      _
    $region25: #{tpu_custom_call.1} parent=1 // pred_fallthru
      _
    // Predicated region
    $region26: #{tpu_custom_call.1} parent=1 // pred_check
      _
    $region27: #{tpu_custom_call.1} parent=1 // pred_check_branch
      %212 = sbr.rel (0) target = $region29
    $region28: #{tpu_custom_call.1} parent=1 // pred_region
      _
    $region29: #{tpu_custom_call.1} parent=1 // pred_fallthru
      _
    %213 = vsyncpa [#allocation3], 1
    %214 = vsyncpa [#allocation5], 1

</llo_original>
